<compile_context>
chip_gen: v5e
topology: v5e:2x2
jax: 0.10.0
libtpu: 0.0.40
codegen_flags: <defaults>
</compile_context>

<pallas_src>
import functools
import math

import jax
import jax.numpy as jnp
from jax.experimental import pallas as pl
from jax.experimental.pallas import tpu as pltpu


def _round_up(x, m):
    return ((x + m - 1) // m) * m


# -----------------------------------------------------------------------------
# Fused whole-MLP kernel: all layers in one pallas_call, activations resident.
# -----------------------------------------------------------------------------
def _fused_mlp_kernel(*refs, n_layers):
    # refs = (x, w0, b0, w1, b1, ..., w_{L-1}, b_{L-1}, out)
    x_ref = refs[0]
    o_ref = refs[-1]
    wb = refs[1:-1]

    h = x_ref[...]
    for k in range(n_layers):
        w = wb[2 * k][...]        # (in_k, out_k_padded)  -- pre-transposed
        b = wb[2 * k + 1][...]    # (1, out_k_padded)
        h = jnp.dot(h, w, preferred_element_type=jnp.float32) + b
        if k != n_layers - 1:     # ReLU after every layer except the last
            h = jnp.maximum(h, 0.0)
    o_ref[...] = h.astype(o_ref.dtype)


def _mlp_forward_fused(x2d, prepared):
    M = x2d.shape[0]
    n_layers = len(prepared)
    out_pad = prepared[-1][0].shape[1]

    args = [x2d]
    in_specs = [pl.BlockSpec(x2d.shape, lambda: (0, 0))]
    for w_t, b_row in prepared:
        args += [w_t, b_row]
        in_specs += [
            pl.BlockSpec(w_t.shape, lambda: (0, 0)),
            pl.BlockSpec(b_row.shape, lambda: (0, 0)),
        ]

    kernel = functools.partial(_fused_mlp_kernel, n_layers=n_layers)
    return pl.pallas_call(
        kernel,
        out_shape=jax.ShapeDtypeStruct((M, out_pad), x2d.dtype),
        in_specs=in_specs,
        out_specs=pl.BlockSpec((M, out_pad), lambda: (0, 0)),
    )(*args)


# -----------------------------------------------------------------------------
# Tiled per-layer Linear kernel (fallback for large layer widths).
# -----------------------------------------------------------------------------
def _tiled_linear_kernel(x_ref, w_ref, b_ref, o_ref, acc_ref, *, apply_relu):
    @pl.when(pl.program_id(2) == 0)
    def _():
        acc_ref[...] = jnp.zeros_like(acc_ref)

    acc_ref[...] += jnp.dot(x_ref[...], w_ref[...],
                            preferred_element_type=jnp.float32)

    @pl.when(pl.program_id(2) == pl.num_programs(2) - 1)
    def _():
        y = acc_ref[...] + b_ref[...]      # bias only in the epilogue
        if apply_relu:
            y = jnp.maximum(y, 0.0)
        o_ref[...] = y.astype(o_ref.dtype)


def _linear_tiled(x, w_t, b_row, *, apply_relu, tm=256, tn=256, tk=512):
    """x: (M, K), w_t: (K, N) (already transposed), b_row: (1, N)."""
    M, K = x.shape
    Kw, N = w_t.shape
    assert K == Kw, (K, Kw)

    tm = min(tm, _round_up(M, 8))
    tn = min(tn, _round_up(N, 128))
    tk = min(tk, _round_up(K, 128))
    Mp, Np, Kp = _round_up(M, tm), _round_up(N, tn), _round_up(K, tk)

    xp = x if (Mp == M and Kp == K) else jnp.pad(x, ((0, Mp - M), (0, Kp - K)))
    wp = w_t if (Kp == K and Np == N) else jnp.pad(w_t, ((0, Kp - K), (0, Np - N)))
    bp = b_row if Np == N else jnp.pad(b_row, ((0, 0), (0, Np - N)))

    kernel = functools.partial(_tiled_linear_kernel, apply_relu=apply_relu)
    out = pl.pallas_call(
        kernel,
        out_shape=jax.ShapeDtypeStruct((Mp, Np), x.dtype),
        grid_spec=pltpu.PrefetchScalarGridSpec(
            num_scalar_prefetch=0,
            grid=(Mp // tm, Np // tn, Kp // tk),
            in_specs=[
                pl.BlockSpec((tm, tk), lambda i, j, k: (i, k)),
                pl.BlockSpec((tk, tn), lambda i, j, k: (k, j)),
                pl.BlockSpec((1, tn), lambda i, j, k: (0, j)),
            ],
            out_specs=pl.BlockSpec((tm, tn), lambda i, j, k: (i, j)),
            scratch_shapes=[pltpu.VMEM((tm, tn), jnp.float32)],
        ),
        compiler_params=pltpu.CompilerParams(
            dimension_semantics=("parallel", "parallel", "arbitrary")),
    )(xp, wp, bp)
    return out[:M, :N]


# -----------------------------------------------------------------------------
# Parameter init (PyTorch layout) and one-time layout preparation.
# -----------------------------------------------------------------------------
def init_mlp_params(key, input_dim, n_layers, size_layers, n_classes):
    """sizes = [input_dim] + [size_layers]*n_layers + [n_classes];
    Linear-style init U(-1/sqrt(fan_in), 1/sqrt(fan_in)); PyTorch (out,in)."""
    sizes = [input_dim] + [size_layers for _ in range(n_layers)] + [n_classes]
    params = []
    for k in range(len(sizes) - 1):
        fan_in, fan_out = sizes[k], sizes[k + 1]
        key, kw, kb = jax.random.split(key, 3)
        bound = 1.0 / math.sqrt(fan_in)
        w = jax.random.uniform(kw, (fan_out, fan_in), jnp.float32, -bound, bound)
        b = jax.random.uniform(kb, (fan_out,), jnp.float32, -bound, bound)
        params.append((w, b))
    return params


def prepare_mlp_params(params, *, lane=128):
    """One-time conversion to kernel layout (hoisted out of the hot path):
    transpose to (in, out) and zero-pad every output width (and the matching
    next-layer input width) to a multiple of `lane` for lane-dense stores."""
    prepared = []
    prev_in_pad = params[0][0].shape[1]   # input_dim: left unpadded
    for w, b in params:
        out_dim, in_dim = w.shape
        out_pad = _round_up(out_dim, lane)
        w_t = jnp.zeros((prev_in_pad, out_pad), jnp.float32)
        w_t = w_t.at[:in_dim, :out_dim].set(w.T.astype(jnp.float32))
        b_row = jnp.zeros((1, out_pad), jnp.float32).at[0, :out_dim].set(b)
        prepared.append((w_t, b_row))
        prev_in_pad = out_pad
    return prepared


def _fused_vmem_bytes(x2d_shape, prepared):
    M, K0 = x2d_shape
    total = 4 * M * K0
    max_w = K0
    for w_t, b_row in prepared:
        total += 4 * (w_t.size + b_row.size)
        max_w = max(max_w, w_t.shape[1])
    total += 4 * 2 * M * max_w            # activation / output headroom
    return total


def mlp_forward(x, prepared, *, n_classes, fused=None):
    # torch.flatten(x, start_dim=1): row-major reshape over trailing dims.
    h = x.reshape(x.shape[0], -1)
    if fused is None:
        # Conservative budget (fits v7x's smaller VMEM with headroom).
        fused = _fused_vmem_bytes(h.shape, prepared) <= 16 * 1024 * 1024
    if fused:
        out = _mlp_forward_fused(h, prepared)
    else:
        n_layers = len(prepared)
        for k, (w_t, b_row) in enumerate(prepared):
            h = _linear_tiled(h, w_t, b_row, apply_relu=(k != n_layers - 1))
        out = h
    return out[:, :n_classes]


if __name__ == "__main__":
    key = jax.random.PRNGKey(0)
    key, kx = jax.random.split(key)

    # Small shapes consistent with the module: batch=2, C=4, H=W=16 -> 1024,
    # n_layers=2, size_layers=32, n_classes=10.
    batch, C, H, W = 2, 4, 16, 16
    n_layers, size_layers, n_classes = 2, 32, 10
    input_dim = C * H * W

    x = jax.random.normal(kx, (batch, C, H, W), jnp.float32)
    params = init_mlp_params(key, input_dim, n_layers, size_layers, n_classes)
    prepared = prepare_mlp_params(params)   # one-time transpose + lane padding

    fwd = jax.jit(mlp_forward, static_argnames=("n_classes", "fused"))

    # Fused single-kernel path (chosen automatically for these sizes).
    out = jax.block_until_ready(fwd(x, prepared, n_classes=n_classes))
    assert out.shape == (batch, n_classes), out.shape

    # Pure-JAX reference (original PyTorch-layout params).
    ref = x.reshape(batch, -1)
    for k, (w, b) in enumerate(params):
        ref = ref @ w.T + b
        if k != len(params) - 1:
            ref = jnp.maximum(ref, 0.0)
    assert jnp.allclose(out, ref, atol=1e-4, rtol=1e-4)

    # Also exercise the tiled per-layer fallback path (used when layers are
    # too large to keep the whole MLP VMEM-resident).
    out_tiled = jax.block_until_ready(
        fwd(x, prepared, n_classes=n_classes, fused=False))
    assert jnp.allclose(out_tiled, ref, atol=1e-4, rtol=1e-4)

    print("KERNEL_OK")
</pallas_src>

<mosaic_0001>
module attributes {stable_mosaic.version = 11 : i64} {
  func.func @_fused_mlp_kernel(%arg0: memref<2x1024xf32, #tpu.memory_space<vmem>>, %arg1: memref<1024x128xf32, #tpu.memory_space<vmem>>, %arg2: memref<1x128xf32, #tpu.memory_space<vmem>>, %arg3: memref<128x128xf32, #tpu.memory_space<vmem>>, %arg4: memref<1x128xf32, #tpu.memory_space<vmem>>, %arg5: memref<128x128xf32, #tpu.memory_space<vmem>>, %arg6: memref<1x128xf32, #tpu.memory_space<vmem>>, %arg7: memref<2x128xf32, #tpu.memory_space<vmem>>) attributes {dimension_semantics = [], scalar_prefetch = 0 : i64, scratch_operands = 0 : i64, tpu.core_type = #tpu.core_type<tc>} {
    %c0 = arith.constant 0 : index
    %c0_0 = arith.constant 0 : index
    %0 = vector.load %arg0[%c0, %c0_0] : memref<2x1024xf32, #tpu.memory_space<vmem>>, vector<2x1024xf32>
    %c0_1 = arith.constant 0 : index
    %c0_2 = arith.constant 0 : index
    %1 = vector.load %arg1[%c0_1, %c0_2] : memref<1024x128xf32, #tpu.memory_space<vmem>>, vector<1024x128xf32>
    %c0_3 = arith.constant 0 : index
    %c0_4 = arith.constant 0 : index
    %2 = vector.load %arg2[%c0_3, %c0_4] : memref<1x128xf32, #tpu.memory_space<vmem>>, vector<1x128xf32>
    %cst = arith.constant dense<0.000000e+00> : vector<2x128xf32>
    %3 = tpu.matmul %0, %1, %cst {dimension_numbers = #tpu.dot_dimension_numbers<[1], [0], [0], [1], [0, 0, 1, 1], [], []>} : vector<2x1024xf32>, vector<1024x128xf32>, vector<2x128xf32> -> vector<2x128xf32>
    %4 = vector.broadcast %2 : vector<1x128xf32> to vector<2x128xf32>
    %5 = arith.addf %3, %4 : vector<2x128xf32>
    %cst_5 = arith.constant 0.000000e+00 : f32
    %6 = vector.broadcast %cst_5 : f32 to vector<2x128xf32>
    %7 = arith.maximumf %5, %6 : vector<2x128xf32>
    %c0_6 = arith.constant 0 : index
    %c0_7 = arith.constant 0 : index
    %8 = vector.load %arg3[%c0_6, %c0_7] : memref<128x128xf32, #tpu.memory_space<vmem>>, vector<128x128xf32>
    %c0_8 = arith.constant 0 : index
    %c0_9 = arith.constant 0 : index
    %9 = vector.load %arg4[%c0_8, %c0_9] : memref<1x128xf32, #tpu.memory_space<vmem>>, vector<1x128xf32>
    %cst_10 = arith.constant dense<0.000000e+00> : vector<2x128xf32>
    %10 = tpu.matmul %7, %8, %cst_10 {dimension_numbers = #tpu.dot_dimension_numbers<[1], [0], [0], [1], [0, 0, 1, 1], [], []>} : vector<2x128xf32>, vector<128x128xf32>, vector<2x128xf32> -> vector<2x128xf32>
    %11 = vector.broadcast %9 : vector<1x128xf32> to vector<2x128xf32>
    %12 = arith.addf %10, %11 : vector<2x128xf32>
    %cst_11 = arith.constant 0.000000e+00 : f32
    %13 = vector.broadcast %cst_11 : f32 to vector<2x128xf32>
    %14 = arith.maximumf %12, %13 : vector<2x128xf32>
    %c0_12 = arith.constant 0 : index
    %c0_13 = arith.constant 0 : index
    %15 = vector.load %arg5[%c0_12, %c0_13] : memref<128x128xf32, #tpu.memory_space<vmem>>, vector<128x128xf32>
    %c0_14 = arith.constant 0 : index
    %c0_15 = arith.constant 0 : index
    %16 = vector.load %arg6[%c0_14, %c0_15] : memref<1x128xf32, #tpu.memory_space<vmem>>, vector<1x128xf32>
    %cst_16 = arith.constant dense<0.000000e+00> : vector<2x128xf32>
    %17 = tpu.matmul %14, %15, %cst_16 {dimension_numbers = #tpu.dot_dimension_numbers<[1], [0], [0], [1], [0, 0, 1, 1], [], []>} : vector<2x128xf32>, vector<128x128xf32>, vector<2x128xf32> -> vector<2x128xf32>
    %18 = vector.broadcast %16 : vector<1x128xf32> to vector<2x128xf32>
    %19 = arith.addf %17, %18 : vector<2x128xf32>
    %c0_17 = arith.constant 0 : index
    %c0_18 = arith.constant 0 : index
    %20 = vector.load %arg7[%c0_17, %c0_18] : memref<2x128xf32, #tpu.memory_space<vmem>>, vector<2x128xf32>
    tpu.vector_store %arg7[%c0_17, %c0_18], %19 {strides = array<i32>} : memref<2x128xf32, #tpu.memory_space<vmem>>, vector<2x128xf32>,
    return
  }
}

</mosaic_0001>

<llo_original>
// kernel: mlp_forward.1
$region0: #{mlp_forward.1}
  #allocation0 [shape = 'u32[]', space=smem, size = 0x4, offset = 0x4, fixed_abs, tag = 'smem constant byte address 0x4 - core index']
  #allocation1 [shape = 'u32[72,128]{1,0:T(1,128)}', space=vmem, size = 0x9000, scoped, tag = 'internal scratch']
  %s0 = inlined_call_operand.vmem [shape: f32[2,1024], index: 0, kind: input, shape index: {}]
  %s1 = inlined_call_operand.hbm [shape: f32[1024,128], index: 1, kind: input, shape index: {}]
  %s2 = inlined_call_operand.vmem [shape: f32[1,128], index: 2, kind: input, shape index: {}]
  %s3 = inlined_call_operand.vmem [shape: f32[128,128], index: 3, kind: input, shape index: {}]
  %s4 = inlined_call_operand.vmem [shape: f32[1,128], index: 4, kind: input, shape index: {}]
  %s5 = inlined_call_operand.hbm [shape: f32[128,128], index: 5, kind: input, shape index: {}]
  %s6 = inlined_call_operand.vmem [shape: f32[1,128], index: 6, kind: input, shape index: {}]
  %s7 = inlined_call_operand.hbm [shape: f32[2,128], index: 7, kind: output, shape index: {}]
  %s8 = sld [smem:[#allocation0]]
  $region46: #{mlp_forward.1} parent=0
    _
  %s10 = ssub.s32 1, %s8
  %s11 = scalar_select 0, %s10, %s8
  $region1: #{mlp_forward.1} parent=0
    #allocation2 [shape = 'u8[524288]{0}', space=vmem, size = 0x80000, scoped, tag = 'input window, operand 1, single buffered']
    #allocation3 [shape = 's32[1]{0}', space=sflag, size = 0x4, scoped, tag = 'scoped memory for mlp_forward.1']
    #allocation4 [shape = 's32[1]{0}', space=sflag, size = 0x4, scoped, tag = 'scoped memory for mlp_forward.1']
    #allocation5 [shape = 'u8[65536]{0}', space=vmem, size = 0x10000, scoped, tag = 'input window, operand 5, single buffered']
    #allocation6 [shape = 's32[1]{0}', space=sflag, size = 0x4, scoped, tag = 'scoped memory for mlp_forward.1']
    #allocation7 [shape = 'u8[1024]{0}', space=vmem, size = 0x400, scoped, tag = 'output window, operand 0, single buffered']
    %12 = vsyncpa [#allocation3], 0
    %13 = vsyncpa [#allocation6], 0
    %14 = vsyncpa [#allocation4], 0
    // Predicated region
    $region2: #{mlp_forward.1} parent=1 // pred_check
      _
    $region3: #{mlp_forward.1} parent=1 // pred_check_branch
      %16 = sbr.rel (0) target = $region5
    $region4: #{mlp_forward.1} parent=1 // pred_region
      _
    $region5: #{mlp_forward.1} parent=1 // pred_fallthru
      _
    // Predicated region
    $region6: #{mlp_forward.1} parent=1 // pred_check
      _
    $region7: #{mlp_forward.1} parent=1 // pred_check_branch
      %18 = sbr.rel (0) target = $region9
    $region8: #{mlp_forward.1} parent=1 // pred_region
      %20 = vsyncadd [#allocation3], 0
      %s21 = sshll.u32 %s1, 4
      %s22 = int_to_ptr.hbm [resolvable:$true] %s21
      %s23 = sshll.u32 [#allocation2], 4
      %s24 = int_to_ptr.vmem [resolvable:$true] %s23
      %29 = dma.hbm_to_vmem [thread:$0]  %s22, 16384, %s24, [#allocation3], 128, 128, 8
    $region9: #{mlp_forward.1} parent=1 // pred_fallthru
      _
    // Predicated region
    $region10: #{mlp_forward.1} parent=1 // pred_check
      _
    $region11: #{mlp_forward.1} parent=1 // pred_check_branch
      %31 = sbr.rel (0) target = $region13
    $region12: #{mlp_forward.1} parent=1 // pred_region
      _
    $region13: #{mlp_forward.1} parent=1 // pred_fallthru
      _
    // Predicated region
    $region14: #{mlp_forward.1} parent=1 // pred_check
      _
    $region15: #{mlp_forward.1} parent=1 // pred_check_branch
      %33 = sbr.rel (0) target = $region17
    $region16: #{mlp_forward.1} parent=1 // pred_region
      _
    $region17: #{mlp_forward.1} parent=1 // pred_fallthru
      _
    // Predicated region
    $region18: #{mlp_forward.1} parent=1 // pred_check
      _
    $region19: #{mlp_forward.1} parent=1 // pred_check_branch
      %35 = sbr.rel (0) target = $region21
    $region20: #{mlp_forward.1} parent=1 // pred_region
      _
    $region21: #{mlp_forward.1} parent=1 // pred_fallthru
      _
    // Predicated region
    $region22: #{mlp_forward.1} parent=1 // pred_check
      _
    $region23: #{mlp_forward.1} parent=1 // pred_check_branch
      %37 = sbr.rel (0) target = $region25
    $region24: #{mlp_forward.1} parent=1 // pred_region
      %39 = vsyncadd [#allocation6], 0
      %s40 = sshll.u32 %s5, 4
      %s41 = int_to_ptr.hbm [resolvable:$true] %s40
      %s42 = sshll.u32 [#allocation5], 4
      %s43 = int_to_ptr.vmem [resolvable:$true] %s42
      %48 = dma.hbm_to_vmem [thread:$0]  %s41, 2048, %s43, [#allocation6], 128, 128, 8
    $region25: #{mlp_forward.1} parent=1 // pred_fallthru
      _
    // Predicated region
    $region26: #{mlp_forward.1} parent=1 // pred_check
      _
    $region27: #{mlp_forward.1} parent=1 // pred_check_branch
      %50 = sbr.rel (0) target = $region29
    $region28: #{mlp_forward.1} parent=1 // pred_region
      _
    $region29: #{mlp_forward.1} parent=1 // pred_fallthru
      _
    // Predicated region
    $region30: #{mlp_forward.1} parent=1 // pred_check
      _
    $region31: #{mlp_forward.1} parent=1 // pred_check_branch
      %52 = sbr.rel (0) target = $region33
    $region32: #{mlp_forward.1} parent=1 // pred_region
      %54 = dma.done [#allocation3], 16384
    $region33: #{mlp_forward.1} parent=1 // pred_fallthru
      _
    // Predicated region
    $region34: #{mlp_forward.1} parent=1 // pred_check
      _
    $region35: #{mlp_forward.1} parent=1 // pred_check_branch
      %56 = sbr.rel (0) target = $region37
    $region36: #{mlp_forward.1} parent=1 // pred_region
      %58 = dma.done [#allocation6], 2048
    $region37: #{mlp_forward.1} parent=1 // pred_fallthru
      _
    %v59 = vld [vmem:[%s0] sm:$0xff]
    %v60 = vld [vmem:[%s0 + $0x8] sm:$0xff]
    %v61 = vld [vmem:[#allocation2] sm:$0xff]
    %v62 = vld [vmem:[#allocation2 + $0x8] sm:$0xff]
    %v63 = vld [vmem:[#allocation2 + $0x10] sm:$0xff]
    %v64 = vld [vmem:[#allocation2 + $0x18] sm:$0xff]
    %v65 = vld [vmem:[#allocation2 + $0x20] sm:$0xff]
    %v66 = vld [vmem:[#allocation2 + $0x28] sm:$0xff]
    %v67 = vld [vmem:[#allocation2 + $0x30] sm:$0xff]
    %v68 = vld [vmem:[#allocation2 + $0x38] sm:$0xff]
    %v69 = vld [vmem:[#allocation2 + $0x40] sm:$0xff]
    %v70 = vld [vmem:[#allocation2 + $0x48] sm:$0xff]
    %v71 = vld [vmem:[#allocation2 + $0x50] sm:$0xff]
    %v72 = vld [vmem:[#allocation2 + $0x58] sm:$0xff]
    %v73 = vld [vmem:[#allocation2 + $0x60] sm:$0xff]
    %v74 = vld [vmem:[#allocation2 + $0x68] sm:$0xff]
    %v75 = vld [vmem:[#allocation2 + $0x70] sm:$0xff]
    %v76 = vld [vmem:[#allocation2 + $0x78] sm:$0xff]
    %v77 = vld [vmem:[#allocation2 + $0x80] sm:$0xff]
    %v78 = vld [vmem:[#allocation2 + $0x88] sm:$0xff]
    %v79 = vld [vmem:[#allocation2 + $0x90] sm:$0xff]
    %v80 = vld [vmem:[#allocation2 + $0x98] sm:$0xff]
    %v81 = vld [vmem:[#allocation2 + $0xa0] sm:$0xff]
    %v82 = vld [vmem:[#allocation2 + $0xa8] sm:$0xff]
    %v83 = vld [vmem:[#allocation2 + $0xb0] sm:$0xff]
    %v84 = vld [vmem:[#allocation2 + $0xb8] sm:$0xff]
    %v85 = vld [vmem:[#allocation2 + $0xc0] sm:$0xff]
    %v86 = vld [vmem:[#allocation2 + $0xc8] sm:$0xff]
    %v87 = vld [vmem:[#allocation2 + $0xd0] sm:$0xff]
    %v88 = vld [vmem:[#allocation2 + $0xd8] sm:$0xff]
    %v89 = vld [vmem:[#allocation2 + $0xe0] sm:$0xff]
    %v90 = vld [vmem:[#allocation2 + $0xe8] sm:$0xff]
    %v91 = vld [vmem:[#allocation2 + $0xf0] sm:$0xff]
    %v92 = vld [vmem:[#allocation2 + $0xf8] sm:$0xff]
    %v93 = vld [vmem:[#allocation2 + $0x100] sm:$0xff]
    %v94 = vld [vmem:[#allocation2 + $0x108] sm:$0xff]
    %v95 = vld [vmem:[#allocation2 + $0x110] sm:$0xff]
    %v96 = vld [vmem:[#allocation2 + $0x118] sm:$0xff]
    %v97 = vld [vmem:[#allocation2 + $0x120] sm:$0xff]
    %v98 = vld [vmem:[#allocation2 + $0x128] sm:$0xff]
    %v99 = vld [vmem:[#allocation2 + $0x130] sm:$0xff]
    %v100 = vld [vmem:[#allocation2 + $0x138] sm:$0xff]
    %v101 = vld [vmem:[#allocation2 + $0x140] sm:$0xff]
    %v102 = vld [vmem:[#allocation2 + $0x148] sm:$0xff]
    %v103 = vld [vmem:[#allocation2 + $0x150] sm:$0xff]
    %v104 = vld [vmem:[#allocation2 + $0x158] sm:$0xff]
    %v105 = vld [vmem:[#allocation2 + $0x160] sm:$0xff]
    %v106 = vld [vmem:[#allocation2 + $0x168] sm:$0xff]
    %v107 = vld [vmem:[#allocation2 + $0x170] sm:$0xff]
    %v108 = vld [vmem:[#allocation2 + $0x178] sm:$0xff]
    %v109 = vld [vmem:[#allocation2 + $0x180] sm:$0xff]
    %v110 = vld [vmem:[#allocation2 + $0x188] sm:$0xff]
    %v111 = vld [vmem:[#allocation2 + $0x190] sm:$0xff]
    %v112 = vld [vmem:[#allocation2 + $0x198] sm:$0xff]
    %v113 = vld [vmem:[#allocation2 + $0x1a0] sm:$0xff]
    %v114 = vld [vmem:[#allocation2 + $0x1a8] sm:$0xff]
    %v115 = vld [vmem:[#allocation2 + $0x1b0] sm:$0xff]
    %v116 = vld [vmem:[#allocation2 + $0x1b8] sm:$0xff]
    %v117 = vld [vmem:[#allocation2 + $0x1c0] sm:$0xff]
    %v118 = vld [vmem:[#allocation2 + $0x1c8] sm:$0xff]
    %v119 = vld [vmem:[#allocation2 + $0x1d0] sm:$0xff]
    %v120 = vld [vmem:[#allocation2 + $0x1d8] sm:$0xff]
    %v121 = vld [vmem:[#allocation2 + $0x1e0] sm:$0xff]
    %v122 = vld [vmem:[#allocation2 + $0x1e8] sm:$0xff]
    %v123 = vld [vmem:[#allocation2 + $0x1f0] sm:$0xff]
    %v124 = vld [vmem:[#allocation2 + $0x1f8] sm:$0xff]
    %v125 = vld [vmem:[#allocation2 + $0x200] sm:$0xff]
    %v126 = vld [vmem:[#allocation2 + $0x208] sm:$0xff]
    %v127 = vld [vmem:[#allocation2 + $0x210] sm:$0xff]
    %v128 = vld [vmem:[#allocation2 + $0x218] sm:$0xff]
    %v129 = vld [vmem:[#allocation2 + $0x220] sm:$0xff]
    %v130 = vld [vmem:[#allocation2 + $0x228] sm:$0xff]
    %v131 = vld [vmem:[#allocation2 + $0x230] sm:$0xff]
    %v132 = vld [vmem:[#allocation2 + $0x238] sm:$0xff]
    %v133 = vld [vmem:[#allocation2 + $0x240] sm:$0xff]
    %v134 = vld [vmem:[#allocation2 + $0x248] sm:$0xff]
    %v135 = vld [vmem:[#allocation2 + $0x250] sm:$0xff]
    %v136 = vld [vmem:[#allocation2 + $0x258] sm:$0xff]
    %v137 = vld [vmem:[#allocation2 + $0x260] sm:$0xff]
    %v138 = vld [vmem:[#allocation2 + $0x268] sm:$0xff]
    %v139 = vld [vmem:[#allocation2 + $0x270] sm:$0xff]
    %v140 = vld [vmem:[#allocation2 + $0x278] sm:$0xff]
    %v141 = vld [vmem:[#allocation2 + $0x280] sm:$0xff]
    %v142 = vld [vmem:[#allocation2 + $0x288] sm:$0xff]
    %v143 = vld [vmem:[#allocation2 + $0x290] sm:$0xff]
    %v144 = vld [vmem:[#allocation2 + $0x298] sm:$0xff]
    %v145 = vld [vmem:[#allocation2 + $0x2a0] sm:$0xff]
    %v146 = vld [vmem:[#allocation2 + $0x2a8] sm:$0xff]
    %v147 = vld [vmem:[#allocation2 + $0x2b0] sm:$0xff]
    %v148 = vld [vmem:[#allocation2 + $0x2b8] sm:$0xff]
    %v149 = vld [vmem:[#allocation2 + $0x2c0] sm:$0xff]
    %v150 = vld [vmem:[#allocation2 + $0x2c8] sm:$0xff]
    %v151 = vld [vmem:[#allocation2 + $0x2d0] sm:$0xff]
    %v152 = vld [vmem:[#allocation2 + $0x2d8] sm:$0xff]
    %v153 = vld [vmem:[#allocation2 + $0x2e0] sm:$0xff]
    %v154 = vld [vmem:[#allocation2 + $0x2e8] sm:$0xff]
    %v155 = vld [vmem:[#allocation2 + $0x2f0] sm:$0xff]
    %v156 = vld [vmem:[#allocation2 + $0x2f8] sm:$0xff]
    %v157 = vld [vmem:[#allocation2 + $0x300] sm:$0xff]
    %v158 = vld [vmem:[#allocation2 + $0x308] sm:$0xff]
    %v159 = vld [vmem:[#allocation2 + $0x310] sm:$0xff]
    %v160 = vld [vmem:[#allocation2 + $0x318] sm:$0xff]
    %v161 = vld [vmem:[#allocation2 + $0x320] sm:$0xff]
    %v162 = vld [vmem:[#allocation2 + $0x328] sm:$0xff]
    %v163 = vld [vmem:[#allocation2 + $0x330] sm:$0xff]
    %v164 = vld [vmem:[#allocation2 + $0x338] sm:$0xff]
    %v165 = vld [vmem:[#allocation2 + $0x340] sm:$0xff]
    %v166 = vld [vmem:[#allocation2 + $0x348] sm:$0xff]
    %v167 = vld [vmem:[#allocation2 + $0x350] sm:$0xff]
    %v168 = vld [vmem:[#allocation2 + $0x358] sm:$0xff]
    %v169 = vld [vmem:[#allocation2 + $0x360] sm:$0xff]
    %v170 = vld [vmem:[#allocation2 + $0x368] sm:$0xff]
    %v171 = vld [vmem:[#allocation2 + $0x370] sm:$0xff]
    %v172 = vld [vmem:[#allocation2 + $0x378] sm:$0xff]
    %v173 = vld [vmem:[#allocation2 + $0x380] sm:$0xff]
    %v174 = vld [vmem:[#allocation2 + $0x388] sm:$0xff]
    %v175 = vld [vmem:[#allocation2 + $0x390] sm:$0xff]
    %v176 = vld [vmem:[#allocation2 + $0x398] sm:$0xff]
    %v177 = vld [vmem:[#allocation2 + $0x3a0] sm:$0xff]
    %v178 = vld [vmem:[#allocation2 + $0x3a8] sm:$0xff]
    %v179 = vld [vmem:[#allocation2 + $0x3b0] sm:$0xff]
    %v180 = vld [vmem:[#allocation2 + $0x3b8] sm:$0xff]
    %v181 = vld [vmem:[#allocation2 + $0x3c0] sm:$0xff]
    %v182 = vld [vmem:[#allocation2 + $0x3c8] sm:$0xff]
    %v183 = vld [vmem:[#allocation2 + $0x3d0] sm:$0xff]
    %v184 = vld [vmem:[#allocation2 + $0x3d8] sm:$0xff]
    %v185 = vld [vmem:[#allocation2 + $0x3e0] sm:$0xff]
    %v186 = vld [vmem:[#allocation2 + $0x3e8] sm:$0xff]
    %v187 = vld [vmem:[#allocation2 + $0x3f0] sm:$0xff]
    %v188 = vld [vmem:[#allocation2 + $0x3f8] sm:$0xff]
    %v189 = vld [vmem:[%s2] sm:$0x1]
    %v191 = vperm.slane %v189, 0
    %195 = vst [vmem:[#allocation1] ss:$4 sm:$0xff] %v59
    %s196 = scalar_lea.vmem [#allocation1], 32
    %197 = vst [vmem:[%s196] ss:$4 sm:$0xff] %v60
    %v198 = vld.sshfl [vmem:[#allocation1] sm:$0xff pattern:$0x73625140]
    %v199 = vld.sshfl [vmem:[#allocation1 + $0x8] sm:$0xff pattern:$0x73625140]
    %v200 = vld.sshfl [vmem:[#allocation1 + $0x10] sm:$0xff pattern:$0x73625140]
    %v201 = vld.sshfl [vmem:[#allocation1 + $0x18] sm:$0xff pattern:$0x73625140]
    %v202 = vld.sshfl [vmem:[#allocation1 + $0x20] sm:$0xff pattern:$0x73625140]
    %v203 = vld.sshfl [vmem:[#allocation1 + $0x28] sm:$0xff pattern:$0x73625140]
    %v204 = vld.sshfl [vmem:[#allocation1 + $0x30] sm:$0xff pattern:$0x73625140]
    %v205 = vld.sshfl [vmem:[#allocation1 + $0x38] sm:$0xff pattern:$0x73625140]
    %214 = vmatpush.msra.mxu0 %v76
    %215 = vmatpush.msra.mxu0 %v75
    %216 = vmatpush.msra.mxu0 %v74
    %217 = vmatpush.msra.mxu0 %v73
    %218 = vmatpush.msra.mxu0 %v72
    %219 = vmatpush.msra.mxu0 %v71
    %220 = vmatpush.msra.mxu0 %v70
    %221 = vmatpush.msra.mxu0 %v69
    %222 = vmatpush.msra.mxu0 %v68
    %223 = vmatpush.msra.mxu0 %v67
    %224 = vmatpush.msra.mxu0 %v66
    %225 = vmatpush.msra.mxu0 %v65
    %226 = vmatpush.msra.mxu0 %v64
    %227 = vmatpush.msra.mxu0 %v63
    %228 = vmatpush.msra.mxu0 %v62
    %229 = vmatpush.msra.mxu0 %v61
    %230 = vmatmul.f32.gmra.mxu0 %v198
    %v231 = vpop.f32.mrf.mxu0
    %v232 = vadd.f32 %v191, %v231
    %233 = vdwg.mxu0
    %234 = vmatpush.msra.mxu0 %v92
    %235 = vmatpush.msra.mxu0 %v91
    %236 = vmatpush.msra.mxu0 %v90
    %237 = vmatpush.msra.mxu0 %v89
    %238 = vmatpush.msra.mxu0 %v88
    %239 = vmatpush.msra.mxu0 %v87
    %240 = vmatpush.msra.mxu0 %v86
    %241 = vmatpush.msra.mxu0 %v85
    %242 = vmatpush.msra.mxu0 %v84
    %243 = vmatpush.msra.mxu0 %v83
    %244 = vmatpush.msra.mxu0 %v82
    %245 = vmatpush.msra.mxu0 %v81
    %246 = vmatpush.msra.mxu0 %v80
    %247 = vmatpush.msra.mxu0 %v79
    %248 = vmatpush.msra.mxu0 %v78
    %249 = vmatpush.msra.mxu0 %v77
    %250 = vmatmul.f32.gmra.mxu0 %v199
    %v251 = vpop.f32.mrf.mxu0
    %v252 = vadd.f32 %v232, %v251
    %253 = vdwg.mxu0
    %254 = vmatpush.msra.mxu0 %v108
    %255 = vmatpush.msra.mxu0 %v107
    %256 = vmatpush.msra.mxu0 %v106
    %257 = vmatpush.msra.mxu0 %v105
    %258 = vmatpush.msra.mxu0 %v104
    %259 = vmatpush.msra.mxu0 %v103
    %260 = vmatpush.msra.mxu0 %v102
    %261 = vmatpush.msra.mxu0 %v101
    %262 = vmatpush.msra.mxu0 %v100
    %263 = vmatpush.msra.mxu0 %v99
    %264 = vmatpush.msra.mxu0 %v98
    %265 = vmatpush.msra.mxu0 %v97
    %266 = vmatpush.msra.mxu0 %v96
    %267 = vmatpush.msra.mxu0 %v95
    %268 = vmatpush.msra.mxu0 %v94
    %269 = vmatpush.msra.mxu0 %v93
    %270 = vmatmul.f32.gmra.mxu0 %v200
    %v271 = vpop.f32.mrf.mxu0
    %v272 = vadd.f32 %v252, %v271
    %273 = vdwg.mxu0
    %274 = vmatpush.msra.mxu0 %v124
    %275 = vmatpush.msra.mxu0 %v123
    %276 = vmatpush.msra.mxu0 %v122
    %277 = vmatpush.msra.mxu0 %v121
    %278 = vmatpush.msra.mxu0 %v120
    %279 = vmatpush.msra.mxu0 %v119
    %280 = vmatpush.msra.mxu0 %v118
    %281 = vmatpush.msra.mxu0 %v117
    %282 = vmatpush.msra.mxu0 %v116
    %283 = vmatpush.msra.mxu0 %v115
    %284 = vmatpush.msra.mxu0 %v114
    %285 = vmatpush.msra.mxu0 %v113
    %286 = vmatpush.msra.mxu0 %v112
    %287 = vmatpush.msra.mxu0 %v111
    %288 = vmatpush.msra.mxu0 %v110
    %289 = vmatpush.msra.mxu0 %v109
    %290 = vmatmul.f32.gmra.mxu0 %v201
    %v291 = vpop.f32.mrf.mxu0
    %v292 = vadd.f32 %v272, %v291
    %293 = vdwg.mxu0
    %294 = vmatpush.msra.mxu0 %v140
    %295 = vmatpush.msra.mxu0 %v139
    %296 = vmatpush.msra.mxu0 %v138
    %297 = vmatpush.msra.mxu0 %v137
    %298 = vmatpush.msra.mxu0 %v136
    %299 = vmatpush.msra.mxu0 %v135
    %300 = vmatpush.msra.mxu0 %v134
    %301 = vmatpush.msra.mxu0 %v133
    %302 = vmatpush.msra.mxu0 %v132
    %303 = vmatpush.msra.mxu0 %v131
    %304 = vmatpush.msra.mxu0 %v130
    %305 = vmatpush.msra.mxu0 %v129
    %306 = vmatpush.msra.mxu0 %v128
    %307 = vmatpush.msra.mxu0 %v127
    %308 = vmatpush.msra.mxu0 %v126
    %309 = vmatpush.msra.mxu0 %v125
    %310 = vmatmul.f32.gmra.mxu0 %v202
    %v311 = vpop.f32.mrf.mxu0
    %v312 = vadd.f32 %v292, %v311
    %313 = vdwg.mxu0
    %314 = vmatpush.msra.mxu0 %v156
    %315 = vmatpush.msra.mxu0 %v155
    %316 = vmatpush.msra.mxu0 %v154
    %317 = vmatpush.msra.mxu0 %v153
    %318 = vmatpush.msra.mxu0 %v152
    %319 = vmatpush.msra.mxu0 %v151
    %320 = vmatpush.msra.mxu0 %v150
    %321 = vmatpush.msra.mxu0 %v149
    %322 = vmatpush.msra.mxu0 %v148
    %323 = vmatpush.msra.mxu0 %v147
    %324 = vmatpush.msra.mxu0 %v146
    %325 = vmatpush.msra.mxu0 %v145
    %326 = vmatpush.msra.mxu0 %v144
    %327 = vmatpush.msra.mxu0 %v143
    %328 = vmatpush.msra.mxu0 %v142
    %329 = vmatpush.msra.mxu0 %v141
    %330 = vmatmul.f32.gmra.mxu0 %v203
    %v331 = vpop.f32.mrf.mxu0
    %v332 = vadd.f32 %v312, %v331
    %333 = vdwg.mxu0
    %334 = vmatpush.msra.mxu0 %v172
    %335 = vmatpush.msra.mxu0 %v171
    %336 = vmatpush.msra.mxu0 %v170
    %337 = vmatpush.msra.mxu0 %v169
    %338 = vmatpush.msra.mxu0 %v168
    %339 = vmatpush.msra.mxu0 %v167
    %340 = vmatpush.msra.mxu0 %v166
    %341 = vmatpush.msra.mxu0 %v165
    %342 = vmatpush.msra.mxu0 %v164
    %343 = vmatpush.msra.mxu0 %v163
    %344 = vmatpush.msra.mxu0 %v162
    %345 = vmatpush.msra.mxu0 %v161
    %346 = vmatpush.msra.mxu0 %v160
    %347 = vmatpush.msra.mxu0 %v159
    %348 = vmatpush.msra.mxu0 %v158
    %349 = vmatpush.msra.mxu0 %v157
    %350 = vmatmul.f32.gmra.mxu0 %v204
    %v351 = vpop.f32.mrf.mxu0
    %v352 = vadd.f32 %v332, %v351
    %353 = vdwg.mxu0
    %354 = vmatpush.msra.mxu0 %v188
    %355 = vmatpush.msra.mxu0 %v187
    %356 = vmatpush.msra.mxu0 %v186
    %357 = vmatpush.msra.mxu0 %v185
    %358 = vmatpush.msra.mxu0 %v184
    %359 = vmatpush.msra.mxu0 %v183
    %360 = vmatpush.msra.mxu0 %v182
    %361 = vmatpush.msra.mxu0 %v181
    %362 = vmatpush.msra.mxu0 %v180
    %363 = vmatpush.msra.mxu0 %v179
    %364 = vmatpush.msra.mxu0 %v178
    %365 = vmatpush.msra.mxu0 %v177
    %366 = vmatpush.msra.mxu0 %v176
    %367 = vmatpush.msra.mxu0 %v175
    %368 = vmatpush.msra.mxu0 %v174
    %369 = vmatpush.msra.mxu0 %v173
    %370 = vmatmul.f32.gmra.mxu0 %v205
    %v371 = vpop.f32.mrf.mxu0
    %v372 = vadd.f32 %v352, %v371
    %373 = vdwg.mxu0
    %v374 = vmax.f32 %v372, 0.0
    %v375 = vld [vmem:[%s3] sm:$0xff]
    %v376 = vld [vmem:[%s3 + $0x8] sm:$0xff]
    %v377 = vld [vmem:[%s3 + $0x10] sm:$0xff]
    %v378 = vld [vmem:[%s3 + $0x18] sm:$0xff]
    %v379 = vld [vmem:[%s3 + $0x20] sm:$0xff]
    %v380 = vld [vmem:[%s3 + $0x28] sm:$0xff]
    %v381 = vld [vmem:[%s3 + $0x30] sm:$0xff]
    %v382 = vld [vmem:[%s3 + $0x38] sm:$0xff]
    %v383 = vld [vmem:[%s3 + $0x40] sm:$0xff]
    %v384 = vld [vmem:[%s3 + $0x48] sm:$0xff]
    %v385 = vld [vmem:[%s3 + $0x50] sm:$0xff]
    %v386 = vld [vmem:[%s3 + $0x58] sm:$0xff]
    %v387 = vld [vmem:[%s3 + $0x60] sm:$0xff]
    %v388 = vld [vmem:[%s3 + $0x68] sm:$0xff]
    %v389 = vld [vmem:[%s3 + $0x70] sm:$0xff]
    %v390 = vld [vmem:[%s3 + $0x78] sm:$0xff]
    %v391 = vld [vmem:[%s4] sm:$0x1]
    %v393 = vperm.slane %v391, 0
    %395 = vmatpush.msra.mxu0 %v390
    %396 = vmatpush.msra.mxu0 %v389
    %397 = vmatpush.msra.mxu0 %v388
    %398 = vmatpush.msra.mxu0 %v387
    %399 = vmatpush.msra.mxu0 %v386
    %400 = vmatpush.msra.mxu0 %v385
    %401 = vmatpush.msra.mxu0 %v384
    %402 = vmatpush.msra.mxu0 %v383
    %403 = vmatpush.msra.mxu0 %v382
    %404 = vmatpush.msra.mxu0 %v381
    %405 = vmatpush.msra.mxu0 %v380
    %406 = vmatpush.msra.mxu0 %v379
    %407 = vmatpush.msra.mxu0 %v378
    %408 = vmatpush.msra.mxu0 %v377
    %409 = vmatpush.msra.mxu0 %v376
    %410 = vmatpush.msra.mxu0 %v375
    %411 = vmatmul.f32.gmra.mxu0 %v374
    %v412 = vpop.f32.mrf.mxu0
    %v413 = vadd.f32 %v393, %v412
    %414 = vdwg.mxu0
    %v415 = vmax.f32 %v413, 0.0
    %v416 = vld [vmem:[#allocation5] sm:$0xff]
    %v417 = vld [vmem:[#allocation5 + $0x8] sm:$0xff]
    %v418 = vld [vmem:[#allocation5 + $0x10] sm:$0xff]
    %v419 = vld [vmem:[#allocation5 + $0x18] sm:$0xff]
    %v420 = vld [vmem:[#allocation5 + $0x20] sm:$0xff]
    %v421 = vld [vmem:[#allocation5 + $0x28] sm:$0xff]
    %v422 = vld [vmem:[#allocation5 + $0x30] sm:$0xff]
    %v423 = vld [vmem:[#allocation5 + $0x38] sm:$0xff]
    %v424 = vld [vmem:[#allocation5 + $0x40] sm:$0xff]
    %v425 = vld [vmem:[#allocation5 + $0x48] sm:$0xff]
    %v426 = vld [vmem:[#allocation5 + $0x50] sm:$0xff]
    %v427 = vld [vmem:[#allocation5 + $0x58] sm:$0xff]
    %v428 = vld [vmem:[#allocation5 + $0x60] sm:$0xff]
    %v429 = vld [vmem:[#allocation5 + $0x68] sm:$0xff]
    %v430 = vld [vmem:[#allocation5 + $0x70] sm:$0xff]
    %v431 = vld [vmem:[#allocation5 + $0x78] sm:$0xff]
    %v432 = vld [vmem:[%s6] sm:$0x1]
    %v434 = vperm.slane %v432, 0
    %436 = vmatpush.msra.mxu0 %v431
    %437 = vmatpush.msra.mxu0 %v430
    %438 = vmatpush.msra.mxu0 %v429
    %439 = vmatpush.msra.mxu0 %v428
    %440 = vmatpush.msra.mxu0 %v427
    %441 = vmatpush.msra.mxu0 %v426
    %442 = vmatpush.msra.mxu0 %v425
    %443 = vmatpush.msra.mxu0 %v424
    %444 = vmatpush.msra.mxu0 %v423
    %445 = vmatpush.msra.mxu0 %v422
    %446 = vmatpush.msra.mxu0 %v421
    %447 = vmatpush.msra.mxu0 %v420
    %448 = vmatpush.msra.mxu0 %v419
    %449 = vmatpush.msra.mxu0 %v418
    %450 = vmatpush.msra.mxu0 %v417
    %451 = vmatpush.msra.mxu0 %v416
    %452 = vmatmul.f32.gmra.mxu0 %v415
    %v453 = vpop.f32.mrf.mxu0
    %v454 = vadd.f32 %v434, %v453
    %455 = vdwg.mxu0
    %456 = vst [vmem:[#allocation7] sm:$0x3] %v454
    // Predicated region
    $region38: #{mlp_forward.1} parent=1 // pred_check
      _
    $region39: #{mlp_forward.1} parent=1 // pred_check_branch
      %458 = sbr.rel (0) target = $region41
    $region40: #{mlp_forward.1} parent=1 // pred_region
      %460 = vsyncadd [#allocation4], 0
      %s462 = sshll.u32 [#allocation7], 4
      %s463 = int_to_ptr.vmem [resolvable:$true] %s462
      %s464 = sshll.u32 %s7, 4
      %s465 = int_to_ptr.hbm [resolvable:$true] %s464
      %467 = dma.vmem_to_hbm [thread:$0]  %s463, 32, %s465, [#allocation4]
    $region41: #{mlp_forward.1} parent=1 // pred_fallthru
      _
    // Predicated region
    $region42: #{mlp_forward.1} parent=1 // pred_check
      _
    $region43: #{mlp_forward.1} parent=1 // pred_check_branch
      %469 = sbr.rel (0) target = $region45
    $region44: #{mlp_forward.1} parent=1 // pred_region
      %471 = dma.done [#allocation4], 32
    $region45: #{mlp_forward.1} parent=1 // pred_fallthru
      _
    %472 = vsyncpa [#allocation3], 1
    %473 = vsyncpa [#allocation6], 1
    %474 = vsyncpa [#allocation4], 1

</llo_original>
